<compile_context>
chip_gen: v5e
topology: v5e:2x2
jax: 0.10.0
libtpu: 0.0.40
codegen_flags: <defaults>
</compile_context>

<pallas_src>
import functools
import math

import jax
import jax.numpy as jnp
from jax.experimental import pallas as pl
from jax.experimental.pallas import tpu as pltpu


# ---------------------------------------------------------------------------
# Pass 1: per-row normalization + 1/sqrt(tau) folding (one N*D pass).
# ---------------------------------------------------------------------------
def _prescale_kernel(x_ref, o_ref, *, inv_sqrt_tau):
    x = x_ref[...].astype(jnp.float32)
    inv = jax.lax.rsqrt(jnp.sum(x * x, axis=1, keepdims=True)) * inv_sqrt_tau
    o_ref[...] = (x * inv).astype(o_ref.dtype)


# ---------------------------------------------------------------------------
# Pass 2: tiled Gram matrix -> per-row  o[k] = log(d_k) - 2*[k even]*s[k,k+1]/tau.
# Summing o over all rows and dividing by N gives the reference loss.
# ---------------------------------------------------------------------------
def _contrastive_rows_kernel(xs_row_ref, xs_col_ref, o_ref, d_acc, pv_acc, *, lanes):
    i = pl.program_id(0)          # row block (parallel)
    j = pl.program_id(1)          # col block (reduction axis, innermost)

    @pl.when(j == 0)
    def _init():
        d_acc[...] = jnp.zeros_like(d_acc)
        pv_acc[...] = jnp.zeros_like(pv_acc)

    # Operands are already normalized and scaled by 1/sqrt(tau) (bf16 by default),
    # so the MXU output is s/tau directly.  Contraction over the last dim of BOTH
    # operands -> no XLU transpose.
    s_t = jax.lax.dot_general(
        xs_row_ref[...], xs_col_ref[...],
        dimension_numbers=(((1,), (1,)), ((), ())),
        preferred_element_type=jnp.float32,
    )                                                  # (T, T) f32
    t = s_t.shape[0]
    groups = t // lanes

    def accumulate(ex):
        # Lane-partial accumulation: fold T columns down to `lanes` columns with
        # cheap VPU adds each step; the single cross-lane (XLU) reduce happens once
        # per row block in the finalize step instead of once per grid step.
        part = ex[:, 0:lanes]
        for g in range(1, groups):
            part = part + ex[:, g * lanes:(g + 1) * lanes]
        d_acc[...] += part

    @pl.when(i != j)
    def _off_diag():
        # No masks needed away from the diagonal tiles.
        accumulate(jnp.exp(s_t))

    @pl.when(i == j)
    def _diag():
        # Diagonal tile only: zero the self-similarity (m = 1 - eye) before exp
        # (exp(0) = 1 exactly matches the reference) and pull the positive-pair
        # entries s[k, k+1]/tau for even k.  Row/col blocks share the same global
        # offset here and T is even, so local iotas have the correct parity.
        lr = jax.lax.broadcasted_iota(jnp.int32, (t, t), 0)
        lc = jax.lax.broadcasted_iota(jnp.int32, (t, t), 1)
        accumulate(jnp.exp(jnp.where(lr == lc, 0.0, s_t)))
        pair = (lr % 2 == 0) & (lc == lr + 1)
        pv_acc[...] = jnp.sum(jnp.where(pair, s_t, 0.0), axis=1, keepdims=True)

    @pl.when(j == pl.num_programs(1) - 1)
    def _finalize():
        d = jnp.sum(d_acc[...], axis=1, keepdims=True)   # one XLU reduce per row block
        # Each positive pair contributes its similarity twice (once per member);
        # pv_acc is nonzero only on even rows, so 2*pv_acc distributes that sum.
        o_ref[...] = jnp.log(d) - 2.0 * pv_acc[...]


# ---------------------------------------------------------------------------
# Wrapper / tiling decisions.
# ---------------------------------------------------------------------------
def _vmem_capacity_bytes():
    try:
        return int(pltpu.get_tpu_info().vmem_capacity_bytes)
    except Exception:
        return 64 << 20   # conservative fallback (v7x per-TC physical VMEM)


def _pick_block(n, target):
    """Largest multiple of 8 <= target that divides n (full-extent fallback)."""
    cand = (min(target, n) // 8) * 8
    while cand >= 8:
        if n % cand == 0:
            return cand
        cand -= 8
    if n <= 1024:
        return n   # small / non-multiple-of-8 N: one full-extent tile (still fits VMEM)
    raise ValueError(
        f"N={n} has no row-block divisor that is a multiple of 8; pad N to a "
        f"multiple of 8 before calling contrastive_loss.")


def _vmem_estimate(t, d, in_itemsize):
    lanes = 128 if t % 128 == 0 else t
    tiles_in = 2 * 2 * t * d * in_itemsize      # 2 operands, double-buffered
    temporaries = 6 * t * t * 4                 # s_t / exp / mask temporaries in flight
    scratch = t * lanes * 4 + 2 * t * 4
    return tiles_in + temporaries + scratch


def contrastive_loss(x, tau=0.1, block_rows=None, use_bf16_matmul=True):
    """x: (N, D) float array, N even. Returns scalar loss (float32).

    Defaults: bf16 MXU feed + bf16 column-stream DMA, tile target 512 (auto-shrunk
    to fit VMEM / divide N).  Set use_bf16_matmul=False for a bit-accurate f32 path.
    Note: exp(s/tau) with |s| <= 1 is safe in f32 for tau >= ~0.01.
    """
    n, d = x.shape
    assert n % 2 == 0, "contrastive loss expects an even number of rows (pairs)"

    matmul_dtype = jnp.bfloat16 if use_bf16_matmul else jnp.float32
    itemsize = jnp.dtype(matmul_dtype).itemsize
    cap = _vmem_capacity_bytes()

    # Largest tile that divides N and fits comfortably in this generation's VMEM.
    target = block_rows if block_rows is not None else 512
    t = _pick_block(n, target)
    while _vmem_estimate(t, d, itemsize) > int(0.6 * cap) and t > 8:
        smaller = _pick_block(n, max(8, t // 2))
        if smaller >= t:
            break
        t = smaller
    # TODO(synk): for very large D (>= ~2048) add an innermost feature-chunk grid axis
    # accumulating s/tau into a (T, T) f32 scratch so T can stay large on v7x's 64 MiB.

    lanes = 128 if t % 128 == 0 else t
    grid = (n // t, n // t)
    inv_sqrt_tau = 1.0 / math.sqrt(float(tau))

    vmem_limit = int(min(max(2 * _vmem_estimate(t, d, itemsize), 32 << 20),
                         (cap * 3) // 4))

    # Pass 1: normalize rows + fold 1/sqrt(tau); emit bf16 so the Gram kernel's
    # DMA stream carries half the bytes and the MXU runs its native bf16 path.
    x_scaled = pl.pallas_call(
        functools.partial(_prescale_kernel, inv_sqrt_tau=inv_sqrt_tau),
        out_shape=jax.ShapeDtypeStruct((n, d), matmul_dtype),
        grid_spec=pltpu.PrefetchScalarGridSpec(
            num_scalar_prefetch=0,
            grid=(n // t,),
            in_specs=[pl.BlockSpec((t, d), lambda i: (i, 0))],
            out_specs=pl.BlockSpec((t, d), lambda i: (i, 0)),
        ),
        compiler_params=pltpu.CompilerParams(
            dimension_semantics=("parallel",),
            vmem_limit_bytes=vmem_limit,
        ),
    )(x)

    cost = pl.CostEstimate(
        flops=int(2 * n * n * d),
        transcendentals=int(n * n + n),
        bytes_accessed=int((n // t + 1) * n * d * itemsize + n * 4),
    )

    per_row = pl.pallas_call(
        functools.partial(_contrastive_rows_kernel, lanes=lanes),
        out_shape=jax.ShapeDtypeStruct((n, 1), jnp.float32),
        grid_spec=pltpu.PrefetchScalarGridSpec(
            num_scalar_prefetch=0,
            grid=grid,
            in_specs=[
                pl.BlockSpec((t, d), lambda i, j: (i, 0)),   # row block (resident over j)
                pl.BlockSpec((t, d), lambda i, j: (j, 0)),   # col block (streamed)
            ],
            out_specs=pl.BlockSpec((t, 1), lambda i, j: (i, 0)),
            scratch_shapes=[
                pltpu.VMEM((t, lanes), jnp.float32),   # lane-partial d accumulator
                pltpu.VMEM((t, 1), jnp.float32),       # positive-pair values (even rows)
            ],
        ),
        compiler_params=pltpu.CompilerParams(
            dimension_semantics=("parallel", "arbitrary"),
            vmem_limit_bytes=vmem_limit,
        ),
        cost_estimate=cost,
    )(x_scaled, x_scaled)

    # Tiny O(N) reduction outside the kernel keeps the row-block axis fully parallel.
    return jnp.sum(per_row) / n


def _reference_loss(x, tau=0.1):
    # Pure-JAX reference mirroring the PyTorch code, for sanity checking.
    x = x.astype(jnp.float32)
    n_rows = x.shape[0]
    b = x @ x.T
    n = jnp.linalg.norm(x, axis=1, keepdims=True)
    s = b / (n @ n.T)
    m = jnp.ones((n_rows,)) - jnp.eye(n_rows)
    d = jnp.sum(jnp.exp(s * m / tau), axis=1)
    k = jnp.arange(n_rows)
    i = (k // 2) * 2
    v = s[i, i + 1]
    return jnp.sum(-jnp.log(jnp.exp(v / tau) / d)) / n_rows


if __name__ == "__main__":
    key = jax.random.PRNGKey(0)
    tau = 0.1
    k1, k2 = jax.random.split(key)

    # Small case: 8 samples (4 positive pairs), dim 32 -> single full-extent tile.
    x_small = jax.random.normal(k1, (8, 32), dtype=jnp.float32)
    ref_small = jax.block_until_ready(_reference_loss(x_small, tau=tau))
    loss_f32 = jax.block_until_ready(
        contrastive_loss(x_small, tau=tau, use_bf16_matmul=False))
    assert jnp.allclose(loss_f32, ref_small, rtol=5e-3, atol=5e-3), (loss_f32, ref_small)
    loss_bf16 = jax.block_until_ready(contrastive_loss(x_small, tau=tau))
    # bf16 cosine sims are amplified ~1/tau inside exp(); loss scalar stays close
    # but the check must be looser than the f32 path.
    assert jnp.allclose(loss_bf16, ref_small, rtol=5e-2, atol=5e-2), (loss_bf16, ref_small)

    # Larger case exercising a 2x2 tile grid (diag/off-diag branches + accumulation).
    x_big = jax.random.normal(k2, (32, 128), dtype=jnp.float32)
    ref_big = jax.block_until_ready(_reference_loss(x_big, tau=tau))
    loss_big_f32 = jax.block_until_ready(
        contrastive_loss(x_big, tau=tau, block_rows=16, use_bf16_matmul=False))
    assert jnp.allclose(loss_big_f32, ref_big, rtol=5e-3, atol=5e-3), (loss_big_f32, ref_big)
    loss_big = jax.block_until_ready(contrastive_loss(x_big, tau=tau, block_rows=16))
    assert jnp.allclose(loss_big, ref_big, rtol=5e-2, atol=5e-2), (loss_big, ref_big)

    print("KERNEL_OK")
</pallas_src>

<mosaic_0001>
module attributes {stable_mosaic.version = 11 : i64} {
  func.func @_prescale_kernel(%arg0: i32, %arg1: memref<8x32xf32, #tpu.memory_space<vmem>>, %arg2: memref<8x32xf32, #tpu.memory_space<vmem>>) attributes {dimension_semantics = [#tpu.dimension_semantics<parallel>], iteration_bounds = array<i64: 1>, scalar_prefetch = 0 : i64, scratch_operands = 0 : i64, tpu.core_type = #tpu.core_type<tc>, window_params = [{transform_indices = @transform_0, window_bounds = array<i64: 8, 32>}, {transform_indices = @transform_1, window_bounds = array<i64: 8, 32>}]} {
    %c0 = arith.constant 0 : index
    %c0_0 = arith.constant 0 : index
    %0 = vector.load %arg1[%c0, %c0_0] : memref<8x32xf32, #tpu.memory_space<vmem>>, vector<8x32xf32>
    %1 = arith.mulf %0, %0 : vector<8x32xf32>
    %cst = arith.constant dense<0.000000e+00> : vector<8xf32>
    %2 = vector.multi_reduction <add>, %1, %cst [1] : vector<8x32xf32> to vector<8xf32>
    %3 = vector.shape_cast %2 : vector<8xf32> to vector<8x1xf32>
    %4 = math.rsqrt %3 : vector<8x1xf32>
    %cst_1 = arith.constant 3.1622777 : f32
    %5 = vector.broadcast %cst_1 : f32 to vector<8x1xf32>
    %6 = arith.mulf %4, %5 : vector<8x1xf32>
    %7 = vector.broadcast %6 : vector<8x1xf32> to vector<8x32xf32>
    %8 = arith.mulf %0, %7 : vector<8x32xf32>
    %c0_2 = arith.constant 0 : index
    %c0_3 = arith.constant 0 : index
    %9 = vector.load %arg2[%c0_2, %c0_3] : memref<8x32xf32, #tpu.memory_space<vmem>>, vector<8x32xf32>
    tpu.vector_store %arg2[%c0_2, %c0_3], %8 {strides = array<i32>} : memref<8x32xf32, #tpu.memory_space<vmem>>, vector<8x32xf32>,
    return
  }
  func.func @transform_0(%arg0: i32) -> (i32, i32) {
    %c0_i32 = arith.constant 0 : i32
    %c0_i32_0 = arith.constant 0 : i32
    return %arg0, %c0_i32 : i32, i32
  }
  func.func @transform_1(%arg0: i32) -> (i32, i32) {
    %c0_i32 = arith.constant 0 : i32
    %c0_i32_0 = arith.constant 0 : i32
    return %arg0, %c0_i32 : i32, i32
  }
}

</mosaic_0001>

<llo_original>
// kernel: tpu_custom_call.1
$region0: #{tpu_custom_call.1}
  #allocation0 [shape = 'u32[]', space=smem, size = 0x4, offset = 0x4, fixed_abs, tag = 'smem constant byte address 0x4 - core index']
  #allocation1 [shape = 'u32[72,128]{1,0:T(1,128)}', space=vmem, size = 0x9000, scoped, tag = 'internal scratch']
  %s0 = inlined_call_operand.hbm [shape: f32[8,32], index: 0, kind: input, shape index: {}]
  %s1 = inlined_call_operand.hbm [shape: f32[8,32], index: 1, kind: output, shape index: {}]
  %s2 = sld [smem:[#allocation0]]
  $region18: #{tpu_custom_call.1} parent=0
    _
  %s4 = ssub.s32 1, %s2
  %s5 = scalar_select 0, %s4, %s2
  $region1: #{tpu_custom_call.1} parent=0
    #allocation2 [shape = 'u8[4096]{0}', space=vmem, size = 0x1000, scoped, tag = 'input window, operand 0, single buffered']
    #allocation3 [shape = 's32[1]{0}', space=sflag, size = 0x4, scoped, tag = 'scoped memory for tpu_custom_call.1']
    #allocation4 [shape = 's32[1]{0}', space=sflag, size = 0x4, scoped, tag = 'scoped memory for tpu_custom_call.1']
    #allocation5 [shape = 'u8[4096]{0}', space=vmem, size = 0x1000, scoped, tag = 'output window, operand 0, single buffered']
    %6 = vsyncpa [#allocation3], 0
    %7 = vsyncpa [#allocation4], 0
    // Predicated region
    $region2: #{tpu_custom_call.1} parent=1 // pred_check
      _
    $region3: #{tpu_custom_call.1} parent=1 // pred_check_branch
      %9 = sbr.rel (0) target = $region5
    $region4: #{tpu_custom_call.1} parent=1 // pred_region
      %11 = vsyncadd [#allocation3], 0
      %s13 = sshll.u32 %s0, 4
      %s14 = int_to_ptr.hbm [resolvable:$true] %s13
      %s15 = sshll.u32 [#allocation2], 4
      %s16 = int_to_ptr.vmem [resolvable:$true] %s15
      %18 = dma.hbm_to_vmem [thread:$0]  %s14, 128, %s16, [#allocation3]
    $region5: #{tpu_custom_call.1} parent=1 // pred_fallthru
      _
    // Predicated region
    $region6: #{tpu_custom_call.1} parent=1 // pred_check
      _
    $region7: #{tpu_custom_call.1} parent=1 // pred_check_branch
      %20 = sbr.rel (0) target = $region9
    $region8: #{tpu_custom_call.1} parent=1 // pred_region
      %22 = dma.done [#allocation3], 128
    $region9: #{tpu_custom_call.1} parent=1 // pred_fallthru
      _
    %v23 = vld [vmem:[#allocation2] sm:$0xff]
    %v24 = vmul.f32 %v23, %v23
    %vm25 = vcmask 261120
    %v26 = vsel %vm25, %v24, 0.0
    %27 = vadd.xlane.f32.xlu0 %v26
    %v28 = vpop.xlane.xlu0 %27
    %v29 = vrsqrt.pop %v28
    %v30 = vmul.f32 %v29, %v28
    %v31 = vmul.f32 %v30, %v29
    %v32 = vmul.f32 0.5, %v31
    %v33 = vsub.f32 1.5, %v32
    %v34 = vmul.f32 %v29, %v33
    %vm35 = vweird.f32 %v28
    %vm36 = vweird.f32 %v29
    %vm37 = vmor %vm35, %vm36
    %v38 = vsel %vm37, %v29, %v34
    %v39 = vmul.f32 %v38, 3.1622777
    %v40 = vmul.f32 %v23, %v39
    %41 = vst.msk [vmem:[#allocation5] sm:$0xff] %vm25, %v40
    // Predicated region
    $region10: #{tpu_custom_call.1} parent=1 // pred_check
      _
    $region11: #{tpu_custom_call.1} parent=1 // pred_check_branch
      %43 = sbr.rel (0) target = $region13
    $region12: #{tpu_custom_call.1} parent=1 // pred_region
      %45 = vsyncadd [#allocation4], 0
      %s47 = sshll.u32 [#allocation5], 4
      %s48 = int_to_ptr.vmem [resolvable:$true] %s47
      %s49 = sshll.u32 %s1, 4
      %s50 = int_to_ptr.hbm [resolvable:$true] %s49
      %52 = dma.vmem_to_hbm [thread:$0]  %s48, 128, %s50, [#allocation4]
    $region13: #{tpu_custom_call.1} parent=1 // pred_fallthru
      _
    // Predicated region
    $region14: #{tpu_custom_call.1} parent=1 // pred_check
      _
    $region15: #{tpu_custom_call.1} parent=1 // pred_check_branch
      %54 = sbr.rel (0) target = $region17
    $region16: #{tpu_custom_call.1} parent=1 // pred_region
      %56 = dma.done [#allocation4], 128
    $region17: #{tpu_custom_call.1} parent=1 // pred_fallthru
      _
    %57 = vsyncpa [#allocation3], 1
    %58 = vsyncpa [#allocation4], 1

</llo_original>
